<compile_context>
chip_gen: v7x
topology: tpu7x:2x2x1
jax: 0.10.0
libtpu: 0.0.40
codegen_flags: <defaults>
</compile_context>

<pallas_src>
import functools

import jax
import jax.numpy as jnp
from jax import lax
from jax.experimental import pallas as pl
from jax.experimental.pallas import tpu as pltpu


_W = 32                            # row-gather DMAs kept in flight per grid step
_FAST_VMEM_BUDGET = 40 << 20       # budget for the VMEM-resident-table fast path
_MAX_OUT_BLOCK_BYTES = 24 << 20    # cap on double-buffered (T, D) output block


def _round_up(x: int, m: int) -> int:
    return ((x + m - 1) // m) * m


def _cdiv(a: int, b: int) -> int:
    return (a + b - 1) // b


# ----------------------------------------------------------------------------
# HBM-table path: ring of in-flight row DMAs, HBM -> output VMEM block.
# ----------------------------------------------------------------------------
def _dma_gather_kernel(ids_ref, table_hbm, o_ref, sems, *, n_tok, gate_tail):
    # ids_ref   : (N_pad,) int32 in SMEM  — scalar-prefetched flat token ids
    # table_hbm : (V, Dp)  in HBM — never copied wholesale
    # o_ref     : (T, Dp)  output tile in VMEM — DMA destination
    # sems      : (_W,)    DMA semaphores — ring bounding in-flight row copies
    T = o_ref.shape[0]
    base = pl.multiple_of(pl.program_id(0) * T, T)

    def _start(i, row):
        pltpu.make_async_copy(
            table_hbm.at[row], o_ref.at[i], sems.at[i % _W]).start()

    def _wait(i):
        # Src here is only a same-sized placeholder; .wait() needs the size.
        # NOTE: keep the row shape/dtype identical to _start's or the
        # semaphore byte accounting breaks.
        pltpu.make_async_copy(
            table_hbm.at[0], o_ref.at[i], sems.at[i % _W]).wait()

    def _gated(i, fn):
        # Skip real DMAs for padded tail tokens; start/wait share the same
        # predicate so the ring never deadlocks.  Branch only exists when the
        # batch is actually ragged (gate_tail is a static Python bool).
        if gate_tail:
            @pl.when(base + i < n_tok)
            def _():
                fn()
        else:
            fn()

    # Prime the window with the first min(_W, T) rows.
    def _prime(i, c):
        _gated(i, lambda: _start(i, ids_ref[base + i]))
        return c

    lax.fori_loop(0, min(_W, T), _prime, 0, unroll=True)

    # Steady state: retire row i, launch row i + _W into the freed slot.
    def _step(i, c):
        # Hoist the SMEM id read + launch predicate ABOVE the wait: .wait()
        # breaks SMEM sst->sld forwarding and would serialize the next
        # descriptor's address math behind DMA completion.
        j = i + _W
        nxt_row = ids_ref[base + jnp.minimum(j, T - 1)]   # clamped: in-bounds
        launch = j < T
        if gate_tail:
            launch = jnp.logical_and(launch, base + j < n_tok)

        _gated(i, lambda: _wait(i))

        @pl.when(launch)
        def _():
            _start(j, nxt_row)

        return c

    lax.fori_loop(0, T, _step, 0, unroll=4)


# ----------------------------------------------------------------------------
# VMEM-resident fast path: no DMA descriptors, just dynamic sublane copies.
# ----------------------------------------------------------------------------
def _vmem_gather_kernel(ids_ref, tab_ref, o_ref):
    # Padded tail ids are 0 (valid row) so no gating is needed; the padded
    # output rows are sliced off in the wrapper.
    T = o_ref.shape[0]
    base = pl.multiple_of(pl.program_id(0) * T, T)

    def _row(i, c):
        row = ids_ref[base + i]
        o_ref[pl.ds(i, 1), :] = tab_ref[pl.ds(row, 1), :]
        return c

    lax.fori_loop(0, T, _row, 0, unroll=8)


# ----------------------------------------------------------------------------
# Wrapper
# ----------------------------------------------------------------------------
def embedding_forward(ids, table, mask=None, *, tokens_per_tile=512,
                      force_hbm=False):
    """Pallas equivalent of Embedding.forward(x, mask).

    `mask` is accepted for API parity but — like the PyTorch module — unused.
    ids: (B, S) int, table: (V, D) float -> (B, S, D) float.
    """
    del mask
    B, S = ids.shape
    V, D = table.shape
    n_tok = B * S
    out_dtype = table.dtype

    # --- pack sub-4-byte tables into u32 rows so each gathered row lands on
    #     dense (8,128) chunks instead of 256 B sublane-strided pieces. -------
    itemsize = table.dtype.itemsize
    ratio = (4 // itemsize) if itemsize in (1, 2) else 1
    packed = ratio > 1 and D % ratio == 0
    if packed:
        table_k = lax.bitcast_convert_type(
            table.reshape(V, D // ratio, ratio), jnp.uint32)
    else:
        table_k = table
    Dp = table_k.shape[1]
    row_bytes = Dp * table_k.dtype.itemsize

    # --- flatten + clamp ids (jnp.take semantics; keeps DMAs in bounds) ------
    ids_flat = jnp.clip(ids.reshape(-1).astype(jnp.int32), 0, V - 1)

    # --- token tile size ------------------------------------------------------
    T = min(tokens_per_tile, _round_up(n_tok, 8))
    # v7x has 2 TensorCores sharing HBM: give the "parallel" grid axis >=4
    # tiles when possible so both cores get work (harmless on v5e/v6e).
    while T > 8 and _cdiv(n_tok, T) < 4:
        T = _round_up(T // 2, 8)
    # Keep the double-buffered output block within budget (v5e scoped VMEM /
    # v7x's 64 MiB physical VMEM).
    while T > 8 and 2 * T * row_bytes > _MAX_OUT_BLOCK_BYTES:
        T = _round_up(T // 2, 8)

    n_pad = _round_up(n_tok, T)
    if n_pad != n_tok:
        ids_flat = jnp.pad(ids_flat, (0, n_pad - n_tok))
    n_tiles = n_pad // T
    # TODO(synk): for very large B*S, block ids per tile through SMEM instead
    # of scalar-prefetching the whole flat array (1-D SMEM pads to next_pow2).

    table_bytes = V * row_bytes
    out_block_bytes = 2 * T * row_bytes          # double-buffered output block
    fast = (not force_hbm) and (
        2 * table_bytes + out_block_bytes + (2 << 20) <= _FAST_VMEM_BUDGET)

    cost = pl.CostEstimate(
        flops=0, transcendentals=0,
        bytes_accessed=int(2 * n_tok * row_bytes + 4 * n_tok))

    if fast:
        needed = 2 * table_bytes + out_block_bytes + (4 << 20)
        out_flat = pl.pallas_call(
            _vmem_gather_kernel,
            out_shape=jax.ShapeDtypeStruct((n_pad, Dp), table_k.dtype),
            grid_spec=pltpu.PrefetchScalarGridSpec(
                num_scalar_prefetch=1,                        # ids -> SMEM
                grid=(n_tiles,),
                in_specs=[pl.BlockSpec((V, Dp), lambda t, ids: (0, 0))],
                out_specs=pl.BlockSpec((T, Dp), lambda t, ids: (t, 0)),
            ),
            compiler_params=pltpu.CompilerParams(
                dimension_semantics=("parallel",),
                vmem_limit_bytes=int(min(max(needed, 32 << 20), 48 << 20))),
            cost_estimate=cost,
        )(ids_flat, table_k)
    else:
        needed = out_block_bytes + (4 << 20)
        kernel = functools.partial(
            _dma_gather_kernel, n_tok=n_tok, gate_tail=(n_pad != n_tok))
        out_flat = pl.pallas_call(
            kernel,
            out_shape=jax.ShapeDtypeStruct((n_pad, Dp), table_k.dtype),
            grid_spec=pltpu.PrefetchScalarGridSpec(
                num_scalar_prefetch=1,                        # ids -> SMEM
                grid=(n_tiles,),
                in_specs=[pl.BlockSpec(memory_space=pl.ANY)],  # table in HBM
                out_specs=pl.BlockSpec((T, Dp), lambda t, ids: (t, 0)),
                scratch_shapes=[pltpu.SemaphoreType.DMA((_W,))],
            ),
            compiler_params=pltpu.CompilerParams(
                dimension_semantics=("parallel",),
                vmem_limit_bytes=int(min(max(needed, 32 << 20), 48 << 20))),
            cost_estimate=cost,
        )(ids_flat, table_k)

    out = out_flat[:n_tok]
    if packed:
        out = lax.bitcast_convert_type(out, table.dtype).reshape(n_tok, D)
    return out.reshape(B, S, D).astype(out_dtype)


if __name__ == "__main__":
    key = jax.random.PRNGKey(0)
    k_tab, k_ids, k2_tab, k2_ids = jax.random.split(key, 4)

    # --- Case 1: tiny shapes -> VMEM-resident fast path ----------------------
    B, S = 2, 8          # batch, sequence length
    V, D = 128, 128      # vocab size, hidden size
    table = jax.random.normal(k_tab, (V, D), dtype=jnp.float32) * 0.02
    ids = jax.random.randint(k_ids, (B, S), 0, V, dtype=jnp.int32)
    mask = jnp.ones((B, S), dtype=jnp.int32)   # unused, parity with PyTorch API

    out = jax.block_until_ready(embedding_forward(ids, table, mask))
    ref = jnp.take(table, ids, axis=0)
    assert out.shape == (B, S, D), out.shape
    assert jnp.array_equal(out, ref), "mismatch vs reference gather (case 1)"

    # --- Case 2: multi-tile grid + ragged (padded) tail, fast path -----------
    B2, S2 = 3, 50       # 150 tokens -> multiple tiles + padded tail
    V2, D2 = 512, 256
    table2 = jax.random.normal(k2_tab, (V2, D2), dtype=jnp.float32) * 0.02
    ids2 = jax.random.randint(k2_ids, (B2, S2), 0, V2, dtype=jnp.int32)
    ref2 = jnp.take(table2, ids2, axis=0)
    out2 = jax.block_until_ready(embedding_forward(ids2, table2))
    assert out2.shape == (B2, S2, D2), out2.shape
    assert jnp.array_equal(out2, ref2), "mismatch vs reference gather (case 2)"

    # --- Case 3: same inputs through the HBM DMA-gather path -----------------
    out3 = jax.block_until_ready(embedding_forward(ids2, table2, force_hbm=True))
    assert jnp.array_equal(out3, ref2), "mismatch vs reference gather (case 3)"

    # --- Case 4/5: bf16 table -> u32-packed rows, both paths -----------------
    table_bf = table2.astype(jnp.bfloat16)
    ref_bf = jnp.take(table_bf, ids2, axis=0)
    out4 = jax.block_until_ready(embedding_forward(ids2, table_bf))
    assert out4.dtype == jnp.bfloat16
    assert jnp.array_equal(out4, ref_bf), "mismatch vs reference gather (case 4)"
    out5 = jax.block_until_ready(
        embedding_forward(ids2, table_bf, force_hbm=True))
    assert jnp.array_equal(out5, ref_bf), "mismatch vs reference gather (case 5)"

    print("KERNEL_OK")
</pallas_src>

<mosaic_0001>
module attributes {stable_mosaic.version = 11 : i64} {
  func.func @_vmem_gather_kernel(%arg0: i32, %arg1: memref<16xi32, #tpu.memory_space<smem>>, %arg2: memref<128x128xf32, #tpu.memory_space<vmem>>, %arg3: memref<8x128xf32, #tpu.memory_space<vmem>>) attributes {dimension_semantics = [#tpu.dimension_semantics<parallel>], iteration_bounds = array<i64: 2>, scalar_prefetch = 1 : i64, scratch_operands = 0 : i64, tpu.core_type = #tpu.core_type<tc>, window_params = [{pipeline_mode = #tpu.pipeline_mode<synchronous>, transform_indices = @transform_0, window_bounds = array<i64: 128, 128>}, {transform_indices = @transform_1, window_bounds = array<i64: 8, 128>}]} {
    %c8_i32 = arith.constant 8 : i32
    %0 = arith.muli %arg0, %c8_i32 : i32
    %1 = tpu.assume_multiple %0, 8 : i32
    %c0_i32 = arith.constant 0 : i32
    %2 = arith.addi %1, %c0_i32 : i32
    %3 = arith.index_cast %2 : i32 to index
    %4 = memref.load %arg1[%3] : memref<16xi32, #tpu.memory_space<smem>>
    %5 = arith.index_cast %4 : i32 to index
    %c0 = arith.constant 0 : index
    %6 = vector.load %arg2[%5, %c0] : memref<128x128xf32, #tpu.memory_space<vmem>>, vector<1x128xf32>
    %7 = arith.index_cast %c0_i32 : i32 to index
    %c0_0 = arith.constant 0 : index
    %8 = vector.load %arg3[%7, %c0_0] : memref<8x128xf32, #tpu.memory_space<vmem>>, vector<1x128xf32>
    tpu.vector_store %arg3[%7, %c0_0], %6 {strides = array<i32>} : memref<8x128xf32, #tpu.memory_space<vmem>>, vector<1x128xf32>,
    %c1_i32 = arith.constant 1 : i32
    %9 = arith.addi %1, %c1_i32 : i32
    %10 = arith.index_cast %9 : i32 to index
    %11 = memref.load %arg1[%10] : memref<16xi32, #tpu.memory_space<smem>>
    %12 = arith.index_cast %11 : i32 to index
    %c0_1 = arith.constant 0 : index
    %13 = vector.load %arg2[%12, %c0_1] : memref<128x128xf32, #tpu.memory_space<vmem>>, vector<1x128xf32>
    %14 = arith.index_cast %c1_i32 : i32 to index
    %c0_2 = arith.constant 0 : index
    %15 = vector.load %arg3[%14, %c0_2] : memref<8x128xf32, #tpu.memory_space<vmem>>, vector<1x128xf32>
    tpu.vector_store %arg3[%14, %c0_2], %13 {strides = array<i32>} : memref<8x128xf32, #tpu.memory_space<vmem>>, vector<1x128xf32>,
    %c2_i32 = arith.constant 2 : i32
    %16 = arith.addi %1, %c2_i32 : i32
    %17 = arith.index_cast %16 : i32 to index
    %18 = memref.load %arg1[%17] : memref<16xi32, #tpu.memory_space<smem>>
    %19 = arith.index_cast %18 : i32 to index
    %c0_3 = arith.constant 0 : index
    %20 = vector.load %arg2[%19, %c0_3] : memref<128x128xf32, #tpu.memory_space<vmem>>, vector<1x128xf32>
    %21 = arith.index_cast %c2_i32 : i32 to index
    %c0_4 = arith.constant 0 : index
    %22 = vector.load %arg3[%21, %c0_4] : memref<8x128xf32, #tpu.memory_space<vmem>>, vector<1x128xf32>
    tpu.vector_store %arg3[%21, %c0_4], %20 {strides = array<i32>} : memref<8x128xf32, #tpu.memory_space<vmem>>, vector<1x128xf32>,
    %c3_i32 = arith.constant 3 : i32
    %23 = arith.addi %1, %c3_i32 : i32
    %24 = arith.index_cast %23 : i32 to index
    %25 = memref.load %arg1[%24] : memref<16xi32, #tpu.memory_space<smem>>
    %26 = arith.index_cast %25 : i32 to index
    %c0_5 = arith.constant 0 : index
    %27 = vector.load %arg2[%26, %c0_5] : memref<128x128xf32, #tpu.memory_space<vmem>>, vector<1x128xf32>
    %28 = arith.index_cast %c3_i32 : i32 to index
    %c0_6 = arith.constant 0 : index
    %29 = vector.load %arg3[%28, %c0_6] : memref<8x128xf32, #tpu.memory_space<vmem>>, vector<1x128xf32>
    tpu.vector_store %arg3[%28, %c0_6], %27 {strides = array<i32>} : memref<8x128xf32, #tpu.memory_space<vmem>>, vector<1x128xf32>,
    %c4_i32 = arith.constant 4 : i32
    %30 = arith.addi %1, %c4_i32 : i32
    %31 = arith.index_cast %30 : i32 to index
    %32 = memref.load %arg1[%31] : memref<16xi32, #tpu.memory_space<smem>>
    %33 = arith.index_cast %32 : i32 to index
    %c0_7 = arith.constant 0 : index
    %34 = vector.load %arg2[%33, %c0_7] : memref<128x128xf32, #tpu.memory_space<vmem>>, vector<1x128xf32>
    %35 = arith.index_cast %c4_i32 : i32 to index
    %c0_8 = arith.constant 0 : index
    %36 = vector.load %arg3[%35, %c0_8] : memref<8x128xf32, #tpu.memory_space<vmem>>, vector<1x128xf32>
    tpu.vector_store %arg3[%35, %c0_8], %34 {strides = array<i32>} : memref<8x128xf32, #tpu.memory_space<vmem>>, vector<1x128xf32>,
    %c5_i32 = arith.constant 5 : i32
    %37 = arith.addi %1, %c5_i32 : i32
    %38 = arith.index_cast %37 : i32 to index
    %39 = memref.load %arg1[%38] : memref<16xi32, #tpu.memory_space<smem>>
    %40 = arith.index_cast %39 : i32 to index
    %c0_9 = arith.constant 0 : index
    %41 = vector.load %arg2[%40, %c0_9] : memref<128x128xf32, #tpu.memory_space<vmem>>, vector<1x128xf32>
    %42 = arith.index_cast %c5_i32 : i32 to index
    %c0_10 = arith.constant 0 : index
    %43 = vector.load %arg3[%42, %c0_10] : memref<8x128xf32, #tpu.memory_space<vmem>>, vector<1x128xf32>
    tpu.vector_store %arg3[%42, %c0_10], %41 {strides = array<i32>} : memref<8x128xf32, #tpu.memory_space<vmem>>, vector<1x128xf32>,
    %c6_i32 = arith.constant 6 : i32
    %44 = arith.addi %1, %c6_i32 : i32
    %45 = arith.index_cast %44 : i32 to index
    %46 = memref.load %arg1[%45] : memref<16xi32, #tpu.memory_space<smem>>
    %47 = arith.index_cast %46 : i32 to index
    %c0_11 = arith.constant 0 : index
    %48 = vector.load %arg2[%47, %c0_11] : memref<128x128xf32, #tpu.memory_space<vmem>>, vector<1x128xf32>
    %49 = arith.index_cast %c6_i32 : i32 to index
    %c0_12 = arith.constant 0 : index
    %50 = vector.load %arg3[%49, %c0_12] : memref<8x128xf32, #tpu.memory_space<vmem>>, vector<1x128xf32>
    tpu.vector_store %arg3[%49, %c0_12], %48 {strides = array<i32>} : memref<8x128xf32, #tpu.memory_space<vmem>>, vector<1x128xf32>,
    %c7_i32 = arith.constant 7 : i32
    %51 = arith.addi %1, %c7_i32 : i32
    %52 = arith.index_cast %51 : i32 to index
    %53 = memref.load %arg1[%52] : memref<16xi32, #tpu.memory_space<smem>>
    %54 = arith.index_cast %53 : i32 to index
    %c0_13 = arith.constant 0 : index
    %55 = vector.load %arg2[%54, %c0_13] : memref<128x128xf32, #tpu.memory_space<vmem>>, vector<1x128xf32>
    %56 = arith.index_cast %c7_i32 : i32 to index
    %c0_14 = arith.constant 0 : index
    %57 = vector.load %arg3[%56, %c0_14] : memref<8x128xf32, #tpu.memory_space<vmem>>, vector<1x128xf32>
    tpu.vector_store %arg3[%56, %c0_14], %55 {strides = array<i32>} : memref<8x128xf32, #tpu.memory_space<vmem>>, vector<1x128xf32>,
    %c8_i32_15 = arith.constant 8 : i32
    return
  }
  func.func @transform_0(%arg0: i32, %arg1: memref<16xi32, #tpu.memory_space<smem>>) -> (i32, i32) {
    %c0_i32 = arith.constant 0 : i32
    %c0_i32_0 = arith.constant 0 : i32
    %c0_i32_1 = arith.constant 0 : i32
    return %c0_i32, %c0_i32_0 : i32, i32
  }
  func.func @transform_1(%arg0: i32, %arg1: memref<16xi32, #tpu.memory_space<smem>>) -> (i32, i32) {
    %c0_i32 = arith.constant 0 : i32
    %c0_i32_0 = arith.constant 0 : i32
    return %arg0, %c0_i32 : i32, i32
  }
}

</mosaic_0001>

<llo_original>
// kernel: tpu_custom_call.1
$region0: #{tpu_custom_call.1}
  #allocation0 [shape = 'u32[]', space=smem, size = 0x4, offset = 0x4, fixed_abs, tag = 'smem constant byte address 0x4 - core index']
  #allocation1 [shape = 'u32[144,128]{1,0:T(1,128)}', space=vmem, size = 0x12000, scoped, tag = 'internal scratch']
  #allocation2 [shape = 's32[1]{0}', space=sflag, size = 0x4, scoped, tag = 'scoped memory for tpu_custom_call.1']
  #allocation3 [shape = 'u8[512]{0}', space=smem, size = 0x200, scoped, tag = 'prefetched SMEM operand 0']
  %s0 = inlined_call_operand.hbm [shape: s32[16], index: 0, kind: input, shape index: {}]
  %s1 = inlined_call_operand.hbm [shape: f32[128,128], index: 1, kind: input, shape index: {}]
  %s2 = inlined_call_operand.hbm [shape: f32[16,128], index: 2, kind: output, shape index: {}]
  %s3 = sld [smem:[#allocation0]]
  $region41: #{tpu_custom_call.1} parent=0
    _
  %s5 = ssub.s32 1, %s3
  %s6 = scalar_select 0, %s5, %s3
  %8 = dma.hbm_to_smem %s0, 16, [#allocation3], [#allocation2]
  %9 = dma.done [#allocation2], 16
  %10 = sfence
  $region1: #{tpu_custom_call.1} parent=0
    #allocation4 [shape = 'u8[65536]{0}', space=vmem, size = 0x10000, scoped, tag = 'input window, operand 1, single buffered']
    #allocation5 [shape = 's32[2]{0}', space=sflag, size = 0x8, scoped, tag = 'scoped memory for tpu_custom_call.1']
    #allocation6 [shape = 's32[2]{0}', space=sflag, size = 0x8, scoped, tag = 'scoped memory for tpu_custom_call.1']
    #allocation7 [shape = 'u8[8192]{0}', space=vmem, size = 0x2000, scoped, tag = 'output window, operand 0']
    %11 = vsyncpa [#allocation5], 0
    %12 = vsyncpa [#allocation6], 0
    %s13 = scalar_lea.sflag [#allocation6], 1
    %14 = vsyncpa %s13, 0
    loop: start=0, step=1, limit=4
    $region2: #{tpu_custom_call.1} parent=1 // loop_pre_header
      _
    $region3: #{tpu_custom_call.1} parent=1 // loop_header
      %s16 = sphi 0, %s20
      %p17 = scmp.ge.s32.totalorder %s16, 4
      %s24 = sphi 0, %s24
      %s26 = sphi 0, %s24
      %s27 = sphi 0, %s26
      %s41 = sphi 0, %s27
      %s47 = sphi 0, %s49
      %s50 = sphi 0, %s47
      %s51 = sphi 0, %s50
      %s67 = sphi 0, %s51
    $region4: #{tpu_custom_call.1} parent=1 // loop_header_branch
      %19 = sbr.rel (%p17) target = $region8
    $region5: #{tpu_custom_call.1} parent=1 // loop_body
      %s21 = ssub.s32 %s16, 1
      %s22 = ssub.s32 %s16, 2
      %s23 = sadd.s32 %s16, 1
      %s25 = sadd.s32 %s24, 1
      %p28 = scmp.eq.s32.totalorder %s16, 1
      %p29 = scmp.ne.s32.totalorder %s24, %s26
      %p30 = scmp.eq.s32.totalorder %s16, 0
      %p31 = por %p29, %p30
      %p32 = scmp.ne.s32.totalorder %s24, %s26
      %p33 = scmp.eq.s32.totalorder %s21, 1
      %p34 = por %p32, %p33
      %p35 = scmp.ne.s32.totalorder %s26, %s27
      %p36 = scmp.eq.s32.totalorder %s21, 0
      %p37 = por %p35, %p36
      %p38 = scmp.ne.s32.totalorder %s26, %s27
      %p39 = scmp.eq.s32.totalorder %s22, 1
      %p40 = por %p38, %p39
      %p42 = scmp.ne.s32.totalorder %s27, %s41
      %p43 = scmp.eq.s32.totalorder %s22, 0
      %p44 = por %p42, %p43
      %s45 = ssub.s32 %s16, %s23
      %p46 = scmp.eq.s32.totalorder %s45, 0
      %s48 = sadd.s32 %s47, 1
      %s49 = scalar_select %p46, %s47, %s48
      %p52 = pneg %p46
      %p53 = scmp.eq.s32.totalorder %s16, 1
      %p54 = por %p52, %p53
      %p55 = scmp.ne.s32.totalorder %s47, %s50
      %p56 = scmp.eq.s32.totalorder %s16, 0
      %p57 = por %p55, %p56
      %p58 = scmp.ne.s32.totalorder %s47, %s50
      %p59 = scmp.eq.s32.totalorder %s21, 1
      %p60 = por %p58, %p59
      %p61 = scmp.ne.s32.totalorder %s50, %s51
      %p62 = scmp.eq.s32.totalorder %s21, 0
      %p63 = por %p61, %p62
      %p64 = scmp.ne.s32.totalorder %s50, %s51
      %p65 = scmp.eq.s32.totalorder %s22, 1
      %p66 = por %p64, %p65
      %p68 = scmp.ne.s32.totalorder %s51, %s67
      %p69 = scmp.eq.s32.totalorder %s22, 0
      %p70 = por %p68, %p69
      %p71 = scmp.le.s32.totalorder 1, %s16
      %p72 = scmp.lt.s32.totalorder %s16, 3
      %p73 = pnand %p71, %p72
      %p74 = pneg %p73
      // Predicated region
      $region9: #{tpu_custom_call.1} parent=5 // pred_check
        _
      $region10: #{tpu_custom_call.1} parent=5 // pred_check_branch
        %76 = sbr.rel (%p73) target = $region12
      $region11: #{tpu_custom_call.1} parent=5 // pred_region
        %s77 = ssub.s32 %s16, 1
        // Predicated region
        $region13: #{tpu_custom_call.1} parent=11 // pred_check
          %p78 = pneg %p37
        $region14: #{tpu_custom_call.1} parent=11 // pred_check_branch
          %80 = sbr.rel (%p78) target = $region16
        $region15: #{tpu_custom_call.1} parent=11 // pred_region
          %s82 = ssub.s32 2048, 2048
          %83 = vsyncadd [#allocation5], %s82
          %s84 = sshll.u32 [#allocation4], 4
          %s85 = int_to_ptr.vmem [resolvable:$true] %s84
          %90 = dma.hbm_to_vmem [thread:$0]  %s1, 2048, %s85, [#allocation5], 128, 128, 8
        $region16: #{tpu_custom_call.1} parent=11 // pred_fallthru
          _
      $region12: #{tpu_custom_call.1} parent=5 // pred_fallthru
        _
      %p91 = scmp.lt.s32.totalorder %s16, 2
      // Predicated region
      $region17: #{tpu_custom_call.1} parent=5 // pred_check
        %p92 = pneg %p91
      $region18: #{tpu_custom_call.1} parent=5 // pred_check_branch
        %94 = sbr.rel (%p92) target = $region20
      $region19: #{tpu_custom_call.1} parent=5 // pred_region
        _
      $region20: #{tpu_custom_call.1} parent=5 // pred_fallthru
        _
      %p95 = scmp.le.s32.totalorder 1, %s16
      %p96 = scmp.lt.s32.totalorder %s16, 3
      %p97 = pnand %p95, %p96
      %p98 = pneg %p97
      // Predicated region
      $region21: #{tpu_custom_call.1} parent=5 // pred_check
        _
      $region22: #{tpu_custom_call.1} parent=5 // pred_check_branch
        %100 = sbr.rel (%p97) target = $region24
      $region23: #{tpu_custom_call.1} parent=5 // pred_region
        %s101 = ssub.s32 %s16, 1
        // Predicated region
        $region25: #{tpu_custom_call.1} parent=23 // pred_check
          %p102 = pneg %p37
        $region26: #{tpu_custom_call.1} parent=23 // pred_check_branch
          %104 = sbr.rel (%p102) target = $region28
        $region27: #{tpu_custom_call.1} parent=23 // pred_region
          %105 = dma.done [#allocation5], 2048
        $region28: #{tpu_custom_call.1} parent=23 // pred_fallthru
          _
        %p106 = pneg %p37
        %p107 = pneg %p34
        %p108 = pneg %p63
        %p109 = pneg %p60
        %s110 = sand.u32 %s50, 1
        %s111 = scalar_lea.sflag [#allocation6], %s110
        %s112 = sand.u32 %s50, 1
        %s113 = smul.addr %s112, 8
        %s114 = scalar_lea.vmem [#allocation7], %s113
        %s115 = smul.u32 %s21, 8
        %s116 = sld [smem:[#allocation3 + %s115]]
        %s117 = scalar_lea.vmem [#allocation4], %s116
        %v118 = vld [vmem:[%s117] sm:$0x1]
        %119 = vst [vmem:[%s114] sm:$0x1] %v118
        %s120 = sadd.s32 %s115, 1
        %s121 = sld [smem:[#allocation3 + %s120]]
        %s122 = scalar_lea.vmem [#allocation4], %s121
        %v123 = vld [vmem:[%s122] sm:$0x1]
        %124 = vst [vmem:[%s114 + $0x1] sm:$0x1] %v123
        %s125 = sadd.s32 %s115, 2
        %s126 = sld [smem:[#allocation3 + %s125]]
        %s127 = scalar_lea.vmem [#allocation4], %s126
        %v128 = vld [vmem:[%s127] sm:$0x1]
        %129 = vst [vmem:[%s114 + $0x2] sm:$0x1] %v128
        %s130 = sadd.s32 %s115, 3
        %s131 = sld [smem:[#allocation3 + %s130]]
        %s132 = scalar_lea.vmem [#allocation4], %s131
        %v133 = vld [vmem:[%s132] sm:$0x1]
        %134 = vst [vmem:[%s114 + $0x3] sm:$0x1] %v133
        %s135 = sadd.s32 %s115, 4
        %s136 = sld [smem:[#allocation3 + %s135]]
        %s137 = scalar_lea.vmem [#allocation4], %s136
        %v138 = vld [vmem:[%s137] sm:$0x1]
        %139 = vst [vmem:[%s114 + $0x4] sm:$0x1] %v138
        %s140 = sadd.s32 %s115, 5
        %s141 = sld [smem:[#allocation3 + %s140]]
        %s142 = scalar_lea.vmem [#allocation4], %s141
        %v143 = vld [vmem:[%s142] sm:$0x1]
        %144 = vst [vmem:[%s114 + $0x5] sm:$0x1] %v143
        %s145 = sadd.s32 %s115, 6
        %s146 = sld [smem:[#allocation3 + %s145]]
        %s147 = scalar_lea.vmem [#allocation4], %s146
        %v148 = vld [vmem:[%s147] sm:$0x1]
        %149 = vst [vmem:[%s114 + $0x6] sm:$0x1] %v148
        %s150 = sadd.s32 %s115, 7
        %s151 = sld [smem:[#allocation3 + %s150]]
        %s152 = scalar_lea.vmem [#allocation4], %s151
        %v153 = vld [vmem:[%s152] sm:$0x1]
        %154 = vst [vmem:[%s114 + $0x7] sm:$0x1] %v153
        %s155 = sand.u32 %s50, 1
        %s156 = scalar_lea.sflag [#allocation6], %s155
        %s157 = sand.u32 %s50, 1
        %s158 = smul.addr %s157, 8
        %s159 = scalar_lea.vmem [#allocation7], %s158
        // Predicated region
        $region29: #{tpu_custom_call.1} parent=23 // pred_check
          %p160 = pneg %p60
        $region30: #{tpu_custom_call.1} parent=23 // pred_check_branch
          %162 = sbr.rel (%p160) target = $region32
        $region31: #{tpu_custom_call.1} parent=23 // pred_region
          %s164 = ssub.s32 128, 128
          %165 = vsyncadd %s156, %s164
          %s166 = smul.addr %s21, 128
          %s167 = scalar_lea.hbm %s2, %s166
          %s169 = sshll.u32 %s159, 4
          %s170 = int_to_ptr.vmem [resolvable:$true] %s169
          %172 = dma.vmem_to_hbm [thread:$0]  %s170, 128, %s167, %s156
        $region32: #{tpu_custom_call.1} parent=23 // pred_fallthru
          _
      $region24: #{tpu_custom_call.1} parent=5 // pred_fallthru
        _
      %p173 = scmp.le.s32.totalorder 2, %s16
      // Predicated region
      $region33: #{tpu_custom_call.1} parent=5 // pred_check
        %p174 = pneg %p173
      $region34: #{tpu_custom_call.1} parent=5 // pred_check_branch
        %176 = sbr.rel (%p174) target = $region36
      $region35: #{tpu_custom_call.1} parent=5 // pred_region
        %s177 = ssub.s32 %s16, 2
        // Predicated region
        $region37: #{tpu_custom_call.1} parent=35 // pred_check
          %p178 = pneg %p66
        $region38: #{tpu_custom_call.1} parent=35 // pred_check_branch
          %180 = sbr.rel (%p178) target = $region40
        $region39: #{tpu_custom_call.1} parent=35 // pred_region
          %s181 = sand.u32 %s51, 1
          %s182 = scalar_lea.sflag [#allocation6], %s181
          %s183 = sand.u32 %s51, 1
          %s184 = smul.addr %s183, 8
          %s185 = scalar_lea.vmem [#allocation7], %s184
          %186 = dma.done %s182, 128
        $region40: #{tpu_custom_call.1} parent=35 // pred_fallthru
          _
      $region36: #{tpu_custom_call.1} parent=5 // pred_fallthru
        _
    $region6: #{tpu_custom_call.1} parent=1 // loop_footer
      %s20 = sadd.s32 1, %s16
    $region7: #{tpu_custom_call.1} parent=1 // loop_footer_branch
      %15 = sbr.rel target = $region3
    $region8: #{tpu_custom_call.1} parent=1 // loop_exit
      _
    %187 = vsyncpa [#allocation5], 1
    %s188 = scalar_lea.sflag [#allocation5], 1
    %189 = vsyncpa %s188, 1
    %190 = vsyncpa [#allocation6], 1
    %s191 = scalar_lea.sflag [#allocation6], 1
    %192 = vsyncpa %s191, 1

</llo_original>
